<compile_context>
chip_gen: v5e
topology: v5e:2x2
jax: 0.10.0
libtpu: 0.0.40
codegen_flags: <defaults>
</compile_context>

<pallas_src>
import functools

import jax
import jax.numpy as jnp
from jax.experimental import pallas as pl
from jax.experimental.pallas import tpu as pltpu


def _round_up(x, m):
    return (x + m - 1) // m * m


def _pick_tile(dim_pad, cap):
    """Largest multiple of 128 <= cap that divides dim_pad (dim_pad is a multiple of 128)."""
    if dim_pad <= cap:
        return dim_pad
    t = (cap // 128) * 128
    while t > 128:
        if dim_pad % t == 0:
            return t
        t -= 128
    return 128


def _hw_config():
    """Generation-aware tile caps / VMEM budget (v7x: 64 MiB VMEM per TC, 2 TCs per chip)."""
    try:
        vmem_cap = pltpu.get_tpu_info().vmem_capacity_bytes
    except Exception:
        vmem_cap = 128 * 1024 * 1024
    if vmem_cap <= 64 * 1024 * 1024:  # v7x
        return dict(tm_cap=1024, tk_cap=1024, tn_cap=1024,
                    vmem_limit=40 * 1024 * 1024, num_cores=2)
    # v5e / v6e: 128 MiB physical VMEM, single TensorCore.
    return dict(tm_cap=1024, tk_cap=1024, tn_cap=1024,
                vmem_limit=64 * 1024 * 1024, num_cores=1)


# ---------------------------------------------------------------------------
# Sweep 1: tiled matmul + per-channel (sum, sum-of-squares) partials.
# ---------------------------------------------------------------------------
def _mm_stats_kernel(x_ref, w_ref, y_ref, stats_ref, acc_ref):
    k = pl.program_id(2)

    @pl.when(k == 0)
    def _init():
        acc_ref[...] = jnp.zeros_like(acc_ref)

    acc_ref[...] += jnp.dot(x_ref[...], w_ref[...],
                            preferred_element_type=jnp.float32)

    @pl.when(k == pl.num_programs(2) - 1)
    def _finalize():
        y = acc_ref[...]
        y_ref[...] = y.astype(y_ref.dtype)
        # Stats come from the f32 accumulator (not the possibly-bf16 y stream).
        stats_ref[0:1, :] = jnp.sum(y, axis=0, keepdims=True)       # per-channel sum
        stats_ref[1:2, :] = jnp.sum(y * y, axis=0, keepdims=True)   # per-channel sumsq


# ---------------------------------------------------------------------------
# Sweep 2: y * scale + shift, ReLU, written in the final output dtype.
# ---------------------------------------------------------------------------
def _bn_relu_kernel(y_ref, scale_ref, shift_ref, o_ref):
    y = y_ref[...].astype(jnp.float32)
    o_ref[...] = jnp.maximum(y * scale_ref[...] + shift_ref[...], 0.0).astype(o_ref.dtype)


def prepare_weight(weight, mxu_dtype=jnp.bfloat16):
    """One-time weight prep hoisted out of the forward: transpose + pad to (F_pad, E_pad) + cast."""
    E, F = weight.shape                          # PyTorch Linear weight is (emb, feature)
    F_pad, E_pad = _round_up(F, 128), _round_up(E, 128)
    wt = weight.T.astype(mxu_dtype)
    if (F_pad, E_pad) == (F, E):
        return wt
    return jnp.zeros((F_pad, E_pad), mxu_dtype).at[:F, :E].set(wt)


def _v_encoder_forward(src, w_padded, gamma, beta, *, eps=1e-5):
    """src: (B, T, feature_size) -> (B, T, emb_size). Training-mode BN forward."""
    B, T, F = src.shape
    E = gamma.shape[0]
    N = B * T
    F_pad, E_pad = w_padded.shape
    assert F_pad == _round_up(F, 128) and E_pad == _round_up(E, 128)

    mxu_dtype = w_padded.dtype              # bf16 (fast path) or f32 (reference numerics)
    y_dtype = mxu_dtype                     # intermediate y stream matches MXU precision
    out_dtype = src.dtype
    in_bytes = jnp.dtype(mxu_dtype).itemsize
    y_bytes = jnp.dtype(y_dtype).itemsize
    out_bytes = jnp.dtype(out_dtype).itemsize

    cfg = _hw_config()
    budget = cfg["vmem_limit"] - (4 << 20)  # headroom for compiler-internal scratch

    # Channel / contraction tiles: lane-dense multiples of 128 dividing the padded dims.
    tn = _pick_tile(E_pad, cfg["tn_cap"])   # et == 1 whenever E_pad <= cap -> x read once
    tk = _pick_tile(F_pad, cfg["tk_cap"])
    et, kt = E_pad // tn, F_pad // tk

    # Row tile: sublane granule depends on packing (16 rows for 2-byte dtypes, 8 for f32).
    sub = max(8, 32 // max(1, min(in_bytes, y_bytes, 4)))
    N_sub = _round_up(N, sub)
    tm = min(_round_up(cfg["tm_cap"], sub), N_sub)

    def _sweep1_bytes(tm_):
        return (2 * tm_ * tk * in_bytes      # x blocks (double-buffered)
                + 2 * tk * tn * in_bytes     # w blocks
                + 2 * tm_ * tn * y_bytes     # y out blocks
                + 2 * 2 * tn * 4             # stats out blocks
                + tm_ * tn * 4)              # f32 accumulator

    while _sweep1_bytes(tm) > budget and tm > sub:
        tm = max(sub, (tm // 2) // sub * sub)

    # v7x megacore: make sure the parallel grid has >= 2 blocks when the problem allows it.
    if cfg["num_cores"] > 1 and et * pl.cdiv(N_sub, tm) < cfg["num_cores"] and N_sub > sub:
        tm = _round_up(-(-N_sub // cfg["num_cores"]), sub)

    N_pad = _round_up(N_sub, tm)
    nt = N_pad // tm

    # Pad x only when needed (zeros in padded rows/cols contribute 0 to matmul and stats).
    x2d = src.reshape(N, F)
    if N_pad == N and F_pad == F:
        x_p = x2d.astype(mxu_dtype)
    else:
        x_p = jnp.zeros((N_pad, F_pad), mxu_dtype).at[:N, :F].set(x2d.astype(mxu_dtype))

    y, stats = pl.pallas_call(
        _mm_stats_kernel,
        out_shape=(
            jax.ShapeDtypeStruct((N_pad, E_pad), y_dtype),
            jax.ShapeDtypeStruct((nt, 2, E_pad), jnp.float32),
        ),
        grid_spec=pltpu.PrefetchScalarGridSpec(
            num_scalar_prefetch=0,
            grid=(nt, et, kt),
            in_specs=[
                pl.BlockSpec((tm, tk), lambda i, j, k: (i, k)),
                pl.BlockSpec((tk, tn), lambda i, j, k: (k, j)),
            ],
            out_specs=(
                pl.BlockSpec((tm, tn), lambda i, j, k: (i, j)),
                pl.BlockSpec((None, 2, tn), lambda i, j, k: (i, 0, j)),
            ),
            scratch_shapes=[pltpu.VMEM((tm, tn), jnp.float32)],
        ),
        compiler_params=pltpu.CompilerParams(
            dimension_semantics=("parallel", "parallel", "arbitrary"),
            vmem_limit_bytes=cfg["vmem_limit"],
        ),
    )(x_p, w_padded)

    # O(E) per-channel fold, outside the hot loops: mean/var -> scale/shift.
    s1 = jnp.sum(stats[:, 0, :], axis=0)
    s2 = jnp.sum(stats[:, 1, :], axis=0)
    mean = s1 / N
    var = jnp.maximum(s2 / N - mean * mean, 0.0)   # biased variance (train-mode BN)
    # Zero-pad gamma/beta so padded channels get scale=shift=0 (robust + sliced off anyway).
    gamma_p = jnp.zeros((E_pad,), jnp.float32).at[:E].set(gamma.astype(jnp.float32))
    beta_p = jnp.zeros((E_pad,), jnp.float32).at[:E].set(beta.astype(jnp.float32))
    scale = gamma_p * jax.lax.rsqrt(var + eps)
    shift = beta_p - mean * scale

    # Sweep 2: wide lane-dense blocks (full channel width when the footprint allows).
    cn = E_pad
    if 2 * tm * cn * (y_bytes + out_bytes) + 4 * cn * 4 > budget:
        cn = tn
    ec = E_pad // cn

    out = pl.pallas_call(
        _bn_relu_kernel,
        out_shape=jax.ShapeDtypeStruct((N_pad, E_pad), out_dtype),
        grid_spec=pltpu.PrefetchScalarGridSpec(
            num_scalar_prefetch=0,
            grid=(nt, ec),
            in_specs=[
                pl.BlockSpec((tm, cn), lambda i, j: (i, j)),
                pl.BlockSpec((1, cn), lambda i, j: (0, j)),
                pl.BlockSpec((1, cn), lambda i, j: (0, j)),
            ],
            out_specs=pl.BlockSpec((tm, cn), lambda i, j: (i, j)),
        ),
        compiler_params=pltpu.CompilerParams(
            dimension_semantics=("parallel", "parallel"),
            vmem_limit_bytes=cfg["vmem_limit"],
        ),
    )(y, scale.reshape(1, E_pad), shift.reshape(1, E_pad))

    if N_pad != N or E_pad != E:
        out = out[:N, :E]
    return out.reshape(B, T, E)        # already src.dtype: no trailing astype pass


v_encoder_forward = jax.jit(_v_encoder_forward, static_argnames=("eps",))


def init_params(key, emb_size, feature_size):
    # Xavier-uniform with gain = calculate_gain('relu') = sqrt(2), as in the module.
    gain = jnp.sqrt(2.0)
    limit = gain * jnp.sqrt(6.0 / (feature_size + emb_size))
    w_key, b_key = jax.random.split(key)
    weight = jax.random.uniform(
        w_key, (emb_size, feature_size), dtype=jnp.float32, minval=-limit, maxval=limit
    )
    # nn.Linear bias default init (untouched by the module's init loop).  The bias is not
    # needed for the forward activation: train-mode BN's batch-mean subtraction cancels it.
    b_limit = 1.0 / jnp.sqrt(jnp.float32(feature_size))
    bias = jax.random.uniform(
        b_key, (emb_size,), dtype=jnp.float32, minval=-b_limit, maxval=b_limit
    )
    gamma = jnp.ones((emb_size,), jnp.float32)   # BatchNorm weight = 1
    beta = jnp.zeros((emb_size,), jnp.float32)   # BatchNorm bias = 0
    return weight, bias, gamma, beta


if __name__ == "__main__":
    key = jax.random.PRNGKey(0)
    B, T = 2, 8
    feature_size, emb_size = 32, 32

    k_x, k_p = jax.random.split(key)
    src = jax.random.normal(k_x, (B, T, feature_size), dtype=jnp.float32)
    weight, bias, gamma, beta = init_params(k_p, emb_size, feature_size)

    # One-time weight prep (transpose + pad + cast) hoisted out of the per-call forward.
    w_bf16 = prepare_weight(weight, jnp.bfloat16)   # fast path: bf16 MXU operands
    w_f32 = prepare_weight(weight, jnp.float32)     # full-precision path (PyTorch numerics)

    out_bf16 = v_encoder_forward(src, w_bf16, gamma, beta)
    out_f32 = v_encoder_forward(src, w_f32, gamma, beta)
    out_bf16, out_f32 = jax.block_until_ready((out_bf16, out_f32))

    # Pure-JAX reference of the PyTorch forward (Linear -> train-mode BN -> ReLU).
    y_full = (src.reshape(B * T, feature_size) @ weight.T) + bias
    mean = y_full.mean(axis=0, keepdims=True)
    var = ((y_full - mean) ** 2).mean(axis=0, keepdims=True)
    ref = jnp.maximum((y_full - mean) / jnp.sqrt(var + 1e-5) * gamma + beta, 0.0)
    ref = ref.reshape(B, T, emb_size)

    assert out_f32.shape == (B, T, emb_size)
    assert out_bf16.shape == (B, T, emb_size)
    assert out_f32.dtype == src.dtype and out_bf16.dtype == src.dtype
    assert jnp.allclose(out_f32, ref, atol=5e-4, rtol=5e-4)
    assert jnp.allclose(out_bf16, ref, atol=5e-2, rtol=5e-2)

    print("KERNEL_OK")
</pallas_src>

<mosaic_0001>
module attributes {stable_mosaic.version = 11 : i64} {
  func.func @_mm_stats_kernel(%arg0: i32, %arg1: i32, %arg2: i32, %arg3: memref<16x128xbf16, #tpu.memory_space<vmem>>, %arg4: memref<128x128xbf16, #tpu.memory_space<vmem>>, %arg5: memref<16x128xbf16, #tpu.memory_space<vmem>>, %arg6: memref<1x2x128xf32, #tpu.memory_space<vmem>>, %arg7: memref<16x128xf32, #tpu.memory_space<vmem>>) attributes {dimension_semantics = [#tpu.dimension_semantics<parallel>, #tpu.dimension_semantics<parallel>, #tpu.dimension_semantics<arbitrary>], iteration_bounds = array<i64: 1, 1, 1>, scalar_prefetch = 0 : i64, scratch_operands = 1 : i64, tpu.core_type = #tpu.core_type<tc>, window_params = [{transform_indices = @transform_0, window_bounds = array<i64: 16, 128>}, {transform_indices = @transform_1, window_bounds = array<i64: 128, 128>}, {transform_indices = @transform_2, window_bounds = array<i64: 16, 128>}, {transform_indices = @transform_3, window_bounds = array<i64: 1, 2, 128>}]} {
    %c0_i32 = arith.constant 0 : i32
    %0 = arith.cmpi eq, %arg2, %c0_i32 : i32
    %1 = arith.extui %0 : i1 to i32
    %c0_i32_0 = arith.constant 0 : i32
    %2 = arith.cmpi ne, %1, %c0_i32_0 : i32
    scf.if %2 {
      %cst_10 = arith.constant 0.000000e+00 : f32
      %12 = vector.broadcast %cst_10 : f32 to vector<16x128xf32>
      %c0_11 = arith.constant 0 : index
      %c0_12 = arith.constant 0 : index
      %13 = vector.load %arg7[%c0_11, %c0_12] : memref<16x128xf32, #tpu.memory_space<vmem>>, vector<16x128xf32>
      tpu.vector_store %arg7[%c0_11, %c0_12], %12 {strides = array<i32>} : memref<16x128xf32, #tpu.memory_space<vmem>>, vector<16x128xf32>,
    } else {
    }
    %c0 = arith.constant 0 : index
    %c0_1 = arith.constant 0 : index
    %3 = vector.load %arg7[%c0, %c0_1] : memref<16x128xf32, #tpu.memory_space<vmem>>, vector<16x128xf32>
    %c0_2 = arith.constant 0 : index
    %c0_3 = arith.constant 0 : index
    %4 = vector.load %arg3[%c0_2, %c0_3] : memref<16x128xbf16, #tpu.memory_space<vmem>>, vector<16x128xbf16>
    %c0_4 = arith.constant 0 : index
    %c0_5 = arith.constant 0 : index
    %5 = vector.load %arg4[%c0_4, %c0_5] : memref<128x128xbf16, #tpu.memory_space<vmem>>, vector<128x128xbf16>
    %cst = arith.constant dense<0.000000e+00> : vector<16x128xf32>
    %6 = tpu.matmul %4, %5, %cst {dimension_numbers = #tpu.dot_dimension_numbers<[1], [0], [0], [1], [0, 0, 1, 1], [], []>} : vector<16x128xbf16>, vector<128x128xbf16>, vector<16x128xf32> -> vector<16x128xf32>
    %7 = arith.addf %3, %6 : vector<16x128xf32>
    %c0_6 = arith.constant 0 : index
    %c0_7 = arith.constant 0 : index
    %8 = vector.load %arg7[%c0_6, %c0_7] : memref<16x128xf32, #tpu.memory_space<vmem>>, vector<16x128xf32>
    tpu.vector_store %arg7[%c0_6, %c0_7], %7 {strides = array<i32>} : memref<16x128xf32, #tpu.memory_space<vmem>>, vector<16x128xf32>,
    %c0_i32_8 = arith.constant 0 : i32
    %9 = arith.cmpi eq, %arg2, %c0_i32_8 : i32
    %10 = arith.extui %9 : i1 to i32
    %c0_i32_9 = arith.constant 0 : i32
    %11 = arith.cmpi ne, %10, %c0_i32_9 : i32
    scf.if %11 {
      %c0_10 = arith.constant 0 : index
      %c0_11 = arith.constant 0 : index
      %12 = vector.load %arg7[%c0_10, %c0_11] : memref<16x128xf32, #tpu.memory_space<vmem>>, vector<16x128xf32>
      %13 = arith.truncf %12 : vector<16x128xf32> to vector<16x128xbf16>
      %c0_12 = arith.constant 0 : index
      %c0_13 = arith.constant 0 : index
      %14 = vector.load %arg5[%c0_12, %c0_13] : memref<16x128xbf16, #tpu.memory_space<vmem>>, vector<16x128xbf16>
      tpu.vector_store %arg5[%c0_12, %c0_13], %13 {strides = array<i32>} : memref<16x128xbf16, #tpu.memory_space<vmem>>, vector<16x128xbf16>,
      %cst_14 = arith.constant dense<0.000000e+00> : vector<128xf32>
      %15 = vector.multi_reduction <add>, %12, %cst_14 [0] : vector<16x128xf32> to vector<128xf32>
      %16 = vector.shape_cast %15 : vector<128xf32> to vector<1x128xf32>
      %c0_15 = arith.constant 0 : index
      %c0_16 = arith.constant 0 : index
      %c0_17 = arith.constant 0 : index
      %17 = vector.load %arg6[%c0_15, %c0_16, %c0_17] : memref<1x2x128xf32, #tpu.memory_space<vmem>>, vector<1x1x128xf32>
      %18 = vector.shape_cast %17 : vector<1x1x128xf32> to vector<1x128xf32>
      %19 = vector.shape_cast %16 : vector<1x128xf32> to vector<1x1x128xf32>
      tpu.vector_store %arg6[%c0_15, %c0_16, %c0_17], %19 {strides = array<i32>} : memref<1x2x128xf32, #tpu.memory_space<vmem>>, vector<1x1x128xf32>,
      %20 = arith.mulf %12, %12 : vector<16x128xf32>
      %cst_18 = arith.constant dense<0.000000e+00> : vector<128xf32>
      %21 = vector.multi_reduction <add>, %20, %cst_18 [0] : vector<16x128xf32> to vector<128xf32>
      %22 = vector.shape_cast %21 : vector<128xf32> to vector<1x128xf32>
      %c0_19 = arith.constant 0 : index
      %c1 = arith.constant 1 : index
      %c0_20 = arith.constant 0 : index
      %23 = vector.load %arg6[%c0_19, %c1, %c0_20] : memref<1x2x128xf32, #tpu.memory_space<vmem>>, vector<1x1x128xf32>
      %24 = vector.shape_cast %23 : vector<1x1x128xf32> to vector<1x128xf32>
      %25 = vector.shape_cast %22 : vector<1x128xf32> to vector<1x1x128xf32>
      tpu.vector_store %arg6[%c0_19, %c1, %c0_20], %25 {strides = array<i32>} : memref<1x2x128xf32, #tpu.memory_space<vmem>>, vector<1x1x128xf32>,
    } else {
    }
    return
  }
  func.func @transform_0(%arg0: i32, %arg1: i32, %arg2: i32) -> (i32, i32) {
    %c0_i32 = arith.constant 0 : i32
    return %arg0, %arg2 : i32, i32
  }
  func.func @transform_1(%arg0: i32, %arg1: i32, %arg2: i32) -> (i32, i32) {
    %c0_i32 = arith.constant 0 : i32
    return %arg2, %arg1 : i32, i32
  }
  func.func @transform_2(%arg0: i32, %arg1: i32, %arg2: i32) -> (i32, i32) {
    %c0_i32 = arith.constant 0 : i32
    return %arg0, %arg1 : i32, i32
  }
  func.func @transform_3(%arg0: i32, %arg1: i32, %arg2: i32) -> (i32, i32, i32) {
    %c0_i32 = arith.constant 0 : i32
    %c0_i32_0 = arith.constant 0 : i32
    return %arg0, %c0_i32, %arg1 : i32, i32, i32
  }
}

module attributes {stable_mosaic.version = 11 : i64} {
  func.func @_bn_relu_kernel(%arg0: i32, %arg1: i32, %arg2: memref<16x128xbf16, #tpu.memory_space<vmem>>, %arg3: memref<1x128xf32, #tpu.memory_space<vmem>>, %arg4: memref<1x128xf32, #tpu.memory_space<vmem>>, %arg5: memref<16x128xf32, #tpu.memory_space<vmem>>) attributes {dimension_semantics = [#tpu.dimension_semantics<parallel>, #tpu.dimension_semantics<parallel>], iteration_bounds = array<i64: 1, 1>, scalar_prefetch = 0 : i64, scratch_operands = 0 : i64, tpu.core_type = #tpu.core_type<tc>, window_params = [{transform_indices = @transform_0, window_bounds = array<i64: 16, 128>}, {transform_indices = @transform_1, window_bounds = array<i64: 1, 128>}, {transform_indices = @transform_2, window_bounds = array<i64: 1, 128>}, {transform_indices = @transform_3, window_bounds = array<i64: 16, 128>}]} {
    %c0 = arith.constant 0 : index
    %c0_0 = arith.constant 0 : index
    %0 = vector.load %arg2[%c0, %c0_0] : memref<16x128xbf16, #tpu.memory_space<vmem>>, vector<16x128xbf16>
    %1 = arith.extf %0 : vector<16x128xbf16> to vector<16x128xf32>
    %c0_1 = arith.constant 0 : index
    %c0_2 = arith.constant 0 : index
    %2 = vector.load %arg3[%c0_1, %c0_2] : memref<1x128xf32, #tpu.memory_space<vmem>>, vector<1x128xf32>
    %3 = vector.broadcast %2 : vector<1x128xf32> to vector<16x128xf32>
    %4 = arith.mulf %1, %3 : vector<16x128xf32>
    %c0_3 = arith.constant 0 : index
    %c0_4 = arith.constant 0 : index
    %5 = vector.load %arg4[%c0_3, %c0_4] : memref<1x128xf32, #tpu.memory_space<vmem>>, vector<1x128xf32>
    %6 = vector.broadcast %5 : vector<1x128xf32> to vector<16x128xf32>
    %7 = arith.addf %4, %6 : vector<16x128xf32>
    %cst = arith.constant 0.000000e+00 : f32
    %8 = vector.broadcast %cst : f32 to vector<16x128xf32>
    %9 = arith.maximumf %7, %8 : vector<16x128xf32>
    %c0_5 = arith.constant 0 : index
    %c0_6 = arith.constant 0 : index
    %10 = vector.load %arg5[%c0_5, %c0_6] : memref<16x128xf32, #tpu.memory_space<vmem>>, vector<16x128xf32>
    tpu.vector_store %arg5[%c0_5, %c0_6], %9 {strides = array<i32>} : memref<16x128xf32, #tpu.memory_space<vmem>>, vector<16x128xf32>,
    return
  }
  func.func @transform_0(%arg0: i32, %arg1: i32) -> (i32, i32) {
    %c0_i32 = arith.constant 0 : i32
    return %arg0, %arg1 : i32, i32
  }
  func.func @transform_1(%arg0: i32, %arg1: i32) -> (i32, i32) {
    %c0_i32 = arith.constant 0 : i32
    %c0_i32_0 = arith.constant 0 : i32
    return %c0_i32, %arg1 : i32, i32
  }
  func.func @transform_2(%arg0: i32, %arg1: i32) -> (i32, i32) {
    %c0_i32 = arith.constant 0 : i32
    %c0_i32_0 = arith.constant 0 : i32
    return %c0_i32, %arg1 : i32, i32
  }
  func.func @transform_3(%arg0: i32, %arg1: i32) -> (i32, i32) {
    %c0_i32 = arith.constant 0 : i32
    return %arg0, %arg1 : i32, i32
  }
}

</mosaic_0001>

<llo_original>
// kernel: _v_encoder_forward.3
$region0: #{_v_encoder_forward.3}
  #allocation0 [shape = 'u32[]', space=smem, size = 0x4, offset = 0x4, fixed_abs, tag = 'smem constant byte address 0x4 - core index']
  #allocation1 [shape = 'u32[72,128]{1,0:T(1,128)}', space=vmem, size = 0x9000, scoped, tag = 'internal scratch']
  %s0 = inlined_call_operand.vmem [shape: bf16[16,128], index: 0, kind: input, shape index: {}]
  %s1 = inlined_call_operand.vmem [shape: f32[1,128], index: 1, kind: input, shape index: {}]
  %s2 = inlined_call_operand.vmem [shape: f32[1,128], index: 2, kind: input, shape index: {}]
  %s3 = inlined_call_operand.vmem [shape: f32[16,128], index: 3, kind: output, shape index: {}]
  %s4 = sld [smem:[#allocation0]]
  $region22: #{_v_encoder_forward.3} parent=0
    _
  %s6 = ssub.s32 1, %s4
  %s7 = scalar_select 0, %s6, %s4
  // Predicated region
  $region2: #{_v_encoder_forward.3} parent=0 // pred_check
    _
  $region3: #{_v_encoder_forward.3} parent=0 // pred_check_branch
    %9 = sbr.rel (0) target = $region5
  $region4: #{_v_encoder_forward.3} parent=0 // pred_region
    _
  $region5: #{_v_encoder_forward.3} parent=0 // pred_fallthru
    _
  // Predicated region
  $region6: #{_v_encoder_forward.3} parent=0 // pred_check
    _
  $region7: #{_v_encoder_forward.3} parent=0 // pred_check_branch
    %11 = sbr.rel (0) target = $region9
  $region8: #{_v_encoder_forward.3} parent=0 // pred_region
    _
  $region9: #{_v_encoder_forward.3} parent=0 // pred_fallthru
    _
  // Predicated region
  $region10: #{_v_encoder_forward.3} parent=0 // pred_check
    _
  $region11: #{_v_encoder_forward.3} parent=0 // pred_check_branch
    %13 = sbr.rel (0) target = $region13
  $region12: #{_v_encoder_forward.3} parent=0 // pred_region
    _
  $region13: #{_v_encoder_forward.3} parent=0 // pred_fallthru
    _
  %v14 = vld [vmem:[%s0] sm:$0xf]
  %v15 = vld [vmem:[%s0 + $0x4] sm:$0xf]
  %v16 = vunpack.c.l.bf16 %v14
  %v17 = vunpack.c.l.bf16 %v15
  %v18 = vld [vmem:[%s1] sm:$0x1]
  %v20 = vperm.slane %v18, 0
  %v22 = vmul.f32 %v16, %v20
  %v23 = vmul.f32 %v17, %v20
  %v24 = vld [vmem:[%s2] sm:$0x1]
  %v26 = vperm.slane %v24, 0
  %v28 = vadd.f32 %v22, %v26
  %v29 = vadd.f32 %v23, %v26
  %v30 = vmax.f32 %v28, 0.0
  %v31 = vmax.f32 %v29, 0.0
  %32 = vst [vmem:[%s3] sm:$0xff] %v30
  %33 = vst [vmem:[%s3 + $0x8] sm:$0xff] %v31
  // Predicated region
  $region14: #{_v_encoder_forward.3} parent=0 // pred_check
    _
  $region15: #{_v_encoder_forward.3} parent=0 // pred_check_branch
    %35 = sbr.rel (0) target = $region17
  $region16: #{_v_encoder_forward.3} parent=0 // pred_region
    _
  $region17: #{_v_encoder_forward.3} parent=0 // pred_fallthru
    _
  // Predicated region
  $region18: #{_v_encoder_forward.3} parent=0 // pred_check
    _
  $region19: #{_v_encoder_forward.3} parent=0 // pred_check_branch
    %37 = sbr.rel (0) target = $region21
  $region20: #{_v_encoder_forward.3} parent=0 // pred_region
    _
  $region21: #{_v_encoder_forward.3} parent=0 // pred_fallthru
    _

// kernel: _v_encoder_forward.2
$region0: #{_v_encoder_forward.2}
  #allocation0 [shape = 'u32[]', space=smem, size = 0x4, offset = 0x4, fixed_abs, tag = 'smem constant byte address 0x4 - core index']
  #allocation1 [shape = 'u32[72,128]{1,0:T(1,128)}', space=vmem, size = 0x9000, scoped, tag = 'internal scratch']
  #allocation2 [shape = 'f32[16,128]{1,0:T(8,128)}', space=vmem, size = 0x2000, scoped, tag = 'scratch operand']
  %s0 = inlined_call_operand.vmem [shape: bf16[16,128], index: 0, kind: input, shape index: {}]
  %s1 = inlined_call_operand.hbm [shape: bf16[128,128], index: 1, kind: input, shape index: {}]
  %s2 = inlined_call_operand.vmem [shape: bf16[16,128], index: 2, kind: output, shape index: {0}]
  %s3 = inlined_call_operand.vmem [shape: f32[1,2,128], index: 3, kind: output, shape index: {1}]
  %4 = xla_tuple %s2, %s3
  %s5 = sld [smem:[#allocation0]]
  $region38: #{_v_encoder_forward.2} parent=0
    _
  %s7 = ssub.s32 1, %s5
  %s8 = scalar_select 0, %s7, %s5
  $region1: #{_v_encoder_forward.2} parent=0
    #allocation3 [shape = 'u8[32768]{0}', space=vmem, size = 0x8000, scoped, tag = 'input window, operand 1, single buffered']
    #allocation4 [shape = 's32[1]{0}', space=sflag, size = 0x4, scoped, tag = 'scoped memory for _v_encoder_forward.2']
    %9 = vsyncpa [#allocation4], 0
    // Predicated region
    $region2: #{_v_encoder_forward.2} parent=1 // pred_check
      _
    $region3: #{_v_encoder_forward.2} parent=1 // pred_check_branch
      %11 = sbr.rel (0) target = $region5
    $region4: #{_v_encoder_forward.2} parent=1 // pred_region
      _
    $region5: #{_v_encoder_forward.2} parent=1 // pred_fallthru
      _
    // Predicated region
    $region6: #{_v_encoder_forward.2} parent=1 // pred_check
      _
    $region7: #{_v_encoder_forward.2} parent=1 // pred_check_branch
      %13 = sbr.rel (0) target = $region9
    $region8: #{_v_encoder_forward.2} parent=1 // pred_region
      %15 = vsyncadd [#allocation4], 0
      %s16 = sshll.u32 %s1, 4
      %s17 = int_to_ptr.hbm [resolvable:$true] %s16
      %s18 = sshll.u32 [#allocation3], 4
      %s19 = int_to_ptr.vmem [resolvable:$true] %s18
      %24 = dma.hbm_to_vmem [thread:$0]  %s17, 1024, %s19, [#allocation4], 64, 64, 4
    $region9: #{_v_encoder_forward.2} parent=1 // pred_fallthru
      _
    // Predicated region
    $region10: #{_v_encoder_forward.2} parent=1 // pred_check
      _
    $region11: #{_v_encoder_forward.2} parent=1 // pred_check_branch
      %26 = sbr.rel (0) target = $region13
    $region12: #{_v_encoder_forward.2} parent=1 // pred_region
      %28 = dma.done [#allocation4], 1024
    $region13: #{_v_encoder_forward.2} parent=1 // pred_fallthru
      _
    %p29 = scmp.eq.s32.totalorder 0, 0
    // Predicated region
    $region14: #{_v_encoder_forward.2} parent=1 // pred_check
      %p30 = pneg %p29
    $region15: #{_v_encoder_forward.2} parent=1 // pred_check_branch
      %32 = sbr.rel (%p30) target = $region17
    $region16: #{_v_encoder_forward.2} parent=1 // pred_region
      %33 = vst [vmem:[#allocation2] sm:$0xff] 0.0
      %34 = vst [vmem:[#allocation2 + $0x8] sm:$0xff] 0.0
    $region17: #{_v_encoder_forward.2} parent=1 // pred_fallthru
      _
    %v35 = vld [vmem:[#allocation2] sm:$0xff]
    %v36 = vld [vmem:[#allocation2 + $0x8] sm:$0xff]
    %v37 = vld [vmem:[%s0] sm:$0xf]
    %v38 = vld [vmem:[%s0 + $0x4] sm:$0xf]
    %v39 = vld [vmem:[#allocation3] sm:$0xf]
    %v40 = vld [vmem:[#allocation3 + $0x4] sm:$0xf]
    %v41 = vld [vmem:[#allocation3 + $0x8] sm:$0xf]
    %v42 = vld [vmem:[#allocation3 + $0xc] sm:$0xf]
    %v43 = vld [vmem:[#allocation3 + $0x10] sm:$0xf]
    %v44 = vld [vmem:[#allocation3 + $0x14] sm:$0xf]
    %v45 = vld [vmem:[#allocation3 + $0x18] sm:$0xf]
    %v46 = vld [vmem:[#allocation3 + $0x1c] sm:$0xf]
    %v47 = vld [vmem:[#allocation3 + $0x20] sm:$0xf]
    %v48 = vld [vmem:[#allocation3 + $0x24] sm:$0xf]
    %v49 = vld [vmem:[#allocation3 + $0x28] sm:$0xf]
    %v50 = vld [vmem:[#allocation3 + $0x2c] sm:$0xf]
    %v51 = vld [vmem:[#allocation3 + $0x30] sm:$0xf]
    %v52 = vld [vmem:[#allocation3 + $0x34] sm:$0xf]
    %v53 = vld [vmem:[#allocation3 + $0x38] sm:$0xf]
    %v54 = vld [vmem:[#allocation3 + $0x3c] sm:$0xf]
    %v57 = vunpack.c.l.b16 %v37
    %v58 = vunpack.c.l.b16 %v38
    %v59 = vpack.c.b16 %v58, %v57
    %v77 = vunpack.c.l.b16 %v39
    %v78 = vunpack.c.l.b16 %v40
    %v79 = vunpack.c.l.b16 %v41
    %v80 = vunpack.c.l.b16 %v42
    %v81 = vunpack.c.l.b16 %v43
    %v82 = vunpack.c.l.b16 %v44
    %v83 = vunpack.c.l.b16 %v45
    %v84 = vunpack.c.l.b16 %v46
    %v85 = vunpack.c.l.b16 %v47
    %v86 = vunpack.c.l.b16 %v48
    %v87 = vunpack.c.l.b16 %v49
    %v88 = vunpack.c.l.b16 %v50
    %v89 = vunpack.c.l.b16 %v51
    %v90 = vunpack.c.l.b16 %v52
    %v91 = vunpack.c.l.b16 %v53
    %v92 = vunpack.c.l.b16 %v54
    %v93 = vpack.c.b16 %v78, %v77
    %v94 = vpack.c.b16 %v80, %v79
    %v95 = vpack.c.b16 %v82, %v81
    %v96 = vpack.c.b16 %v84, %v83
    %v97 = vpack.c.b16 %v86, %v85
    %v98 = vpack.c.b16 %v88, %v87
    %v99 = vpack.c.b16 %v90, %v89
    %v100 = vpack.c.b16 %v92, %v91
    %109 = vmatpush.bf16.msra.mxu0 %v100
    %110 = vmatpush.bf16.msra.mxu0 %v99
    %111 = vmatpush.bf16.msra.mxu0 %v98
    %112 = vmatpush.bf16.msra.mxu0 %v97
    %113 = vmatpush.bf16.msra.mxu0 %v96
    %114 = vmatpush.bf16.msra.mxu0 %v95
    %115 = vmatpush.bf16.msra.mxu0 %v94
    %116 = vmatpush.bf16.msra.mxu0 %v93
    %117 = vmatmul.bf16.gmra.mxu0 %v59
    %v118 = vpop.f32.mrf.mxu0
    %v119 = vadd.f32 0.0, %v118
    %v120 = vpop.f32.mrf.mxu0
    %v121 = vadd.f32 0.0, %v120
    %122 = vdwg.mxu0
    %v123 = vadd.f32 %v35, %v119
    %v124 = vadd.f32 %v36, %v121
    %125 = vst [vmem:[#allocation2] sm:$0xff] %v123
    %126 = vst [vmem:[#allocation2 + $0x8] sm:$0xff] %v124
    // Predicated region
    $region18: #{_v_encoder_forward.2} parent=1 // pred_check
      %p127 = pneg %p29
    $region19: #{_v_encoder_forward.2} parent=1 // pred_check_branch
      %129 = sbr.rel (%p127) target = $region21
    $region20: #{_v_encoder_forward.2} parent=1 // pred_region
      %v130 = vld [vmem:[#allocation2] sm:$0xff]
      %v131 = vld [vmem:[#allocation2 + $0x8] sm:$0xff]
      %v132 = vpack.c.bf16 %v130, %v130
      %v133 = vpack.c.bf16 %v131, %v131
      %134 = vst [vmem:[%s2] sm:$0xf] %v132
      %135 = vst [vmem:[%s2 + $0x4] sm:$0xf] %v133
      %v136 = vadd.f32 %v130, %v131
      %v137 = vrot.slane %v136, 4
      %v138 = vadd.f32 %v136, %v137
      %v139 = vrot.slane %v138, 2
      %v140 = vadd.f32 %v138, %v139
      %v141 = vrot.slane %v140, 1
      %v142 = vadd.f32 %v140, %v141
      %143 = vst [vmem:[%s3] sm:$0x1] %v142
      %v144 = vmul.f32 %v130, %v130
      %v145 = vmul.f32 %v131, %v131
      %v146 = vadd.f32 %v144, %v145
      %v147 = vrot.slane %v146, 4
      %v148 = vadd.f32 %v146, %v147
      %v149 = vrot.slane %v148, 2
      %v150 = vadd.f32 %v148, %v149
      %v151 = vrot.slane %v150, 1
      %v152 = vadd.f32 %v150, %v151
      %153 = vst [vmem:[%s3 + $0x1] sm:$0x1] %v152
    $region21: #{_v_encoder_forward.2} parent=1 // pred_fallthru
      _
    // Predicated region
    $region22: #{_v_encoder_forward.2} parent=1 // pred_check
      _
    $region23: #{_v_encoder_forward.2} parent=1 // pred_check_branch
      %155 = sbr.rel (0) target = $region25
    $region24: #{_v_encoder_forward.2} parent=1 // pred_region
      _
    $region25: #{_v_encoder_forward.2} parent=1 // pred_fallthru
      _
    // Predicated region
    $region26: #{_v_encoder_forward.2} parent=1 // pred_check
      _
    $region27: #{_v_encoder_forward.2} parent=1 // pred_check_branch
      %157 = sbr.rel (0) target = $region29
    $region28: #{_v_encoder_forward.2} parent=1 // pred_region
      _
    $region29: #{_v_encoder_forward.2} parent=1 // pred_fallthru
      _
    // Predicated region
    $region30: #{_v_encoder_forward.2} parent=1 // pred_check
      _
    $region31: #{_v_encoder_forward.2} parent=1 // pred_check_branch
      %159 = sbr.rel (0) target = $region33
    $region32: #{_v_encoder_forward.2} parent=1 // pred_region
      _
    $region33: #{_v_encoder_forward.2} parent=1 // pred_fallthru
      _
    // Predicated region
    $region34: #{_v_encoder_forward.2} parent=1 // pred_check
      _
    $region35: #{_v_encoder_forward.2} parent=1 // pred_check_branch
      %161 = sbr.rel (0) target = $region37
    $region36: #{_v_encoder_forward.2} parent=1 // pred_region
      _
    $region37: #{_v_encoder_forward.2} parent=1 // pred_fallthru
      _
    %162 = vsyncpa [#allocation4], 1

</llo_original>
